<compile_context>
chip_gen: v7x
topology: tpu7x:2x2x1
jax: 0.10.0
libtpu: 0.0.40
codegen_flags: <defaults>
</compile_context>

<pallas_src>
import functools
import math

import jax
import jax.numpy as jnp
from jax.experimental import pallas as pl
from jax.experimental.pallas import tpu as pltpu


def _round_up(x, m):
    return ((x + m - 1) // m) * m


def _choose_tile(n, max_tile=256):
    # Sublane-aligned node tile: multiple of 8, capped at max_tile.
    return min(max_tile, _round_up(n, 8))


_VMEM_LIMIT = 32 * 1024 * 1024  # fits v5e/v6e/v7x scoped VMEM comfortably


# ---------------------------------------------------------------------------
# Kernel 1: SAGE mean-aggregate layer (concat=True, optional ReLU)
# ---------------------------------------------------------------------------

def _sage_layer_kernel(neigh_ref, self_ref, wrep_ref, sw_ref, out_ref, *,
                       out_ch, apply_relu):
    # neigh_ref: (T, S*D)  self_ref: (T, D)  wrep_ref: (S*D, O)  sw_ref: (D, O)
    # out_ref:   (T, 2*O)  -- each half stored directly (no concatenate).
    out_n = jnp.dot(neigh_ref[...], wrep_ref[...],
                    preferred_element_type=jnp.float32)        # mean folded into K
    x_i = jnp.dot(self_ref[...], sw_ref[...],
                  preferred_element_type=jnp.float32)
    if apply_relu:
        out_n = jnp.maximum(out_n, 0.0)
        x_i = jnp.maximum(x_i, 0.0)
    out_ref[:, :out_ch] = out_n.astype(out_ref.dtype)
    out_ref[:, out_ch:] = x_i.astype(out_ref.dtype)


def sage_mean_layer(neighbor_feats, self_feats, weight, self_weight, *,
                    apply_relu, max_tile=256):
    """SAGELayer (mean aggregator, concat=True, no bias)."""
    N, S, D = neighbor_feats.shape
    O = weight.shape[1]

    # Fold the neighbor mean into the matmul's K dimension.
    neigh_flat = neighbor_feats.reshape(N, S * D)
    w_rep = jnp.tile(weight / jnp.float32(S), (S, 1))          # (S*D, O)

    tile = _choose_tile(N, max_tile)
    n_pad = _round_up(N, tile)
    if n_pad != N:
        neigh_flat = jnp.pad(neigh_flat, ((0, n_pad - N), (0, 0)))
        self_feats = jnp.pad(self_feats, ((0, n_pad - N), (0, 0)))

    kernel = functools.partial(_sage_layer_kernel, out_ch=O, apply_relu=apply_relu)
    out = pl.pallas_call(
        kernel,
        out_shape=jax.ShapeDtypeStruct((n_pad, 2 * O), jnp.float32),
        grid=(n_pad // tile,),
        in_specs=[
            pl.BlockSpec((tile, S * D), lambda i: (i, 0)),     # streamed over nodes
            pl.BlockSpec((tile, D), lambda i: (i, 0)),         # streamed over nodes
            pl.BlockSpec((S * D, O), lambda i: (0, 0)),        # weights stay resident
            pl.BlockSpec((D, O), lambda i: (0, 0)),
        ],
        out_specs=pl.BlockSpec((tile, 2 * O), lambda i: (i, 0)),
        compiler_params=pltpu.CompilerParams(
            dimension_semantics=("parallel",),
            vmem_limit_bytes=_VMEM_LIMIT),
    )(neigh_flat, self_feats, w_rep, self_weight)
    return out[:N]


# ---------------------------------------------------------------------------
# Kernel 2: last SAGE layer fused with L2-normalize + Linear classifier
# ---------------------------------------------------------------------------

def _sage_layer_norm_pred_kernel(neigh_ref, self_ref, wrep_ref, sw_ref,
                                 pwn_ref, pws_ref, b_ref, out_ref):
    # neigh_ref: (T, S*D)  self_ref: (T, D)  wrep_ref: (S*D, O)  sw_ref: (D, O)
    # pwn_ref:   (O, C) classifier rows for the neighbor half
    # pws_ref:   (O, C) classifier rows for the self half
    # b_ref:     (1, C)  out_ref: (T, C)
    out_n = jnp.dot(neigh_ref[...], wrep_ref[...],
                    preferred_element_type=jnp.float32)        # (T, O)
    x_i = jnp.dot(self_ref[...], sw_ref[...],
                  preferred_element_type=jnp.float32)          # (T, O)
    # Layer-1 activation is identity in the reference model.
    sumsq = (jnp.sum(out_n * out_n, axis=-1, keepdims=True)
             + jnp.sum(x_i * x_i, axis=-1, keepdims=True))     # ||concat||^2
    inv = jax.lax.rsqrt(jnp.maximum(sumsq, 1e-24))             # == 1/clamp(||x||,1e-12)
    # normalize-then-linear == (linear) scaled by inv, since inv is per-row scalar.
    y = (jnp.dot(out_n, pwn_ref[...], preferred_element_type=jnp.float32)
         + jnp.dot(x_i, pws_ref[...], preferred_element_type=jnp.float32))
    y = y * inv + b_ref[...].astype(jnp.float32)
    out_ref[...] = y.astype(out_ref.dtype)


def sage_last_layer_predict(neighbor_feats, self_feats, weight, self_weight,
                            pred_w_t, pred_b, *, max_tile=256):
    """Last SAGELayer (concat, identity act) + F.normalize(p=2) + pred Linear, fused."""
    N, S, D = neighbor_feats.shape
    O = weight.shape[1]
    C = pred_w_t.shape[1]

    neigh_flat = neighbor_feats.reshape(N, S * D)
    w_rep = jnp.tile(weight / jnp.float32(S), (S, 1))          # (S*D, O)
    pw_n = pred_w_t[:O]                                        # (O, C)
    pw_s = pred_w_t[O:]                                        # (O, C)
    b2d = pred_b.reshape(1, C)

    tile = _choose_tile(N, max_tile)
    n_pad = _round_up(N, tile)
    if n_pad != N:
        neigh_flat = jnp.pad(neigh_flat, ((0, n_pad - N), (0, 0)))
        self_feats = jnp.pad(self_feats, ((0, n_pad - N), (0, 0)))

    out = pl.pallas_call(
        _sage_layer_norm_pred_kernel,
        out_shape=jax.ShapeDtypeStruct((n_pad, C), jnp.float32),
        grid=(n_pad // tile,),
        in_specs=[
            pl.BlockSpec((tile, S * D), lambda i: (i, 0)),
            pl.BlockSpec((tile, D), lambda i: (i, 0)),
            pl.BlockSpec((S * D, O), lambda i: (0, 0)),        # weights stay resident
            pl.BlockSpec((D, O), lambda i: (0, 0)),
            pl.BlockSpec((O, C), lambda i: (0, 0)),
            pl.BlockSpec((O, C), lambda i: (0, 0)),
            pl.BlockSpec((1, C), lambda i: (0, 0)),
        ],
        out_specs=pl.BlockSpec((tile, C), lambda i: (i, 0)),
        compiler_params=pltpu.CompilerParams(
            dimension_semantics=("parallel",),
            vmem_limit_bytes=_VMEM_LIMIT),
    )(neigh_flat, self_feats, w_rep, self_weight, pw_n, pw_s, b2d)
    return out[:N]


# ---------------------------------------------------------------------------
# GraphSAGE model (agg_type='mean', concat=True)
# ---------------------------------------------------------------------------

def glorot(key, shape):
    fan_in, fan_out = shape[0], shape[1]
    limit = math.sqrt(6.0 / (fan_in + fan_out))
    return jax.random.uniform(key, shape, jnp.float32, -limit, limit)


def init_graphsage_params(key, in_dim, out_dim, num_class=41):
    k = jax.random.split(key, 6)
    return {
        # layer 0: SAGELayer(in_dim, 128, act=relu, concat=True)
        "w0": glorot(k[0], (in_dim, 128)),
        "sw0": glorot(k[1], (in_dim, 128)),
        # layer 1: SAGELayer(256, out_dim, concat=True)
        "w1": glorot(k[2], (128 * 2, out_dim)),
        "sw1": glorot(k[3], (128 * 2, out_dim)),
        # pred_layer: Linear(out_dim*2, num_class)  (stored transposed: (F, C))
        "pred_w_t": glorot(k[4], (out_dim * 2, num_class)),
        "pred_b": jax.random.uniform(k[5], (num_class,), jnp.float32,
                                     -1.0 / math.sqrt(out_dim * 2),
                                     1.0 / math.sqrt(out_dim * 2)),
    }


def graphsage_forward(params, feats, start_nodes, adj_last, num_sample_list,
                      in_dim, out_dim):
    """Mirrors GraphSAGE.forward with agg_type='mean', concat=True."""
    num_start_node = len(start_nodes)
    index_neighbor_self = []
    for each in num_sample_list:
        index_neighbor_self.insert(0, each * num_start_node)
        num_start_node = each * num_start_node + num_start_node

    output = feats[adj_last]                        # gather (glue, plain JAX)
    rev_samples = list(reversed(num_sample_list))

    # ---- layer 0: SAGELayer(in_dim, 128, act=relu, concat=True) ----
    split0 = index_neighbor_self[0]
    s0 = rev_samples[0]
    neighbor0 = output[-split0:].reshape(-1, s0, in_dim)
    self0 = output[:-split0].reshape(-1, in_dim)
    output = sage_mean_layer(neighbor0, self0, params["w0"], params["sw0"],
                             apply_relu=True)

    # ---- layer 1 (identity act) fused with F.normalize + pred_layer ----
    split1 = index_neighbor_self[1]
    s1 = rev_samples[1]
    d1 = 128 * 2
    neighbor1 = output[-split1:].reshape(-1, s1, d1)
    self1 = output[:-split1].reshape(-1, d1)
    return sage_last_layer_predict(neighbor1, self1, params["w1"], params["sw1"],
                                   params["pred_w_t"], params["pred_b"])


# ---------------------------------------------------------------------------
# Main
# ---------------------------------------------------------------------------

if __name__ == "__main__":
    key = jax.random.PRNGKey(0)
    k_feat, k_adj, k_param = jax.random.split(key, 3)

    in_dim = 16
    out_dim = 32
    num_class = 41

    B = 2                          # len(start_nodes)
    num_sample_list = [3, 4]       # hop-1 fanout, hop-2 fanout
    s1, s2 = num_sample_list
    total_nodes = B * (s1 + 1) * (s2 + 1)   # 40 gathered node rows

    num_feat_nodes = 50
    feats = jax.random.normal(k_feat, (num_feat_nodes, in_dim), jnp.float32)
    adj_last = jax.random.randint(k_adj, (total_nodes,), 0, num_feat_nodes)
    start_nodes = list(range(B))

    params = init_graphsage_params(k_param, in_dim, out_dim, num_class)

    out = graphsage_forward(params, feats, start_nodes, adj_last,
                            list(num_sample_list), in_dim, out_dim)
    out = jax.block_until_ready(out)
    assert out.shape == (B, num_class), out.shape
    print("KERNEL_OK")
</pallas_src>

<mosaic_0001>
module attributes {stable_mosaic.version = 11 : i64} {
  func.func @_sage_layer_kernel(%arg0: i32, %arg1: memref<8x64xf32, #tpu.memory_space<vmem>>, %arg2: memref<8x16xf32, #tpu.memory_space<vmem>>, %arg3: memref<64x128xf32, #tpu.memory_space<vmem>>, %arg4: memref<16x128xf32, #tpu.memory_space<vmem>>, %arg5: memref<8x256xf32, #tpu.memory_space<vmem>>) attributes {dimension_semantics = [#tpu.dimension_semantics<parallel>], iteration_bounds = array<i64: 1>, scalar_prefetch = 0 : i64, scratch_operands = 0 : i64, tpu.core_type = #tpu.core_type<tc>, window_params = [{transform_indices = @transform_0, window_bounds = array<i64: 8, 64>}, {transform_indices = @transform_1, window_bounds = array<i64: 8, 16>}, {pipeline_mode = #tpu.pipeline_mode<synchronous>, transform_indices = @transform_2, window_bounds = array<i64: 64, 128>}, {pipeline_mode = #tpu.pipeline_mode<synchronous>, transform_indices = @transform_3, window_bounds = array<i64: 16, 128>}, {transform_indices = @transform_4, window_bounds = array<i64: 8, 256>}]} {
    %c0 = arith.constant 0 : index
    %c0_0 = arith.constant 0 : index
    %0 = vector.load %arg1[%c0, %c0_0] : memref<8x64xf32, #tpu.memory_space<vmem>>, vector<8x64xf32>
    %c0_1 = arith.constant 0 : index
    %c0_2 = arith.constant 0 : index
    %1 = vector.load %arg3[%c0_1, %c0_2] : memref<64x128xf32, #tpu.memory_space<vmem>>, vector<64x128xf32>
    %cst = arith.constant dense<0.000000e+00> : vector<8x128xf32>
    %2 = tpu.matmul %0, %1, %cst {dimension_numbers = #tpu.dot_dimension_numbers<[1], [0], [0], [1], [0, 0, 1, 1], [], []>} : vector<8x64xf32>, vector<64x128xf32>, vector<8x128xf32> -> vector<8x128xf32>
    %c0_3 = arith.constant 0 : index
    %c0_4 = arith.constant 0 : index
    %3 = vector.load %arg2[%c0_3, %c0_4] : memref<8x16xf32, #tpu.memory_space<vmem>>, vector<8x16xf32>
    %c0_5 = arith.constant 0 : index
    %c0_6 = arith.constant 0 : index
    %4 = vector.load %arg4[%c0_5, %c0_6] : memref<16x128xf32, #tpu.memory_space<vmem>>, vector<16x128xf32>
    %cst_7 = arith.constant dense<0.000000e+00> : vector<8x128xf32>
    %5 = tpu.matmul %3, %4, %cst_7 {dimension_numbers = #tpu.dot_dimension_numbers<[1], [0], [0], [1], [0, 0, 1, 1], [], []>} : vector<8x16xf32>, vector<16x128xf32>, vector<8x128xf32> -> vector<8x128xf32>
    %cst_8 = arith.constant 0.000000e+00 : f32
    %6 = vector.broadcast %cst_8 : f32 to vector<8x128xf32>
    %7 = arith.maximumf %2, %6 : vector<8x128xf32>
    %cst_9 = arith.constant 0.000000e+00 : f32
    %8 = vector.broadcast %cst_9 : f32 to vector<8x128xf32>
    %9 = arith.maximumf %5, %8 : vector<8x128xf32>
    %c0_10 = arith.constant 0 : index
    %c0_11 = arith.constant 0 : index
    %10 = vector.load %arg5[%c0_10, %c0_11] : memref<8x256xf32, #tpu.memory_space<vmem>>, vector<8x128xf32>
    tpu.vector_store %arg5[%c0_10, %c0_11], %7 {strides = array<i32>} : memref<8x256xf32, #tpu.memory_space<vmem>>, vector<8x128xf32>,
    %c0_12 = arith.constant 0 : index
    %c128 = arith.constant 128 : index
    %11 = vector.load %arg5[%c0_12, %c128] : memref<8x256xf32, #tpu.memory_space<vmem>>, vector<8x128xf32>
    tpu.vector_store %arg5[%c0_12, %c128], %9 {strides = array<i32>} : memref<8x256xf32, #tpu.memory_space<vmem>>, vector<8x128xf32>,
    return
  }
  func.func @transform_0(%arg0: i32) -> (i32, i32) {
    %c0_i32 = arith.constant 0 : i32
    %c0_i32_0 = arith.constant 0 : i32
    return %arg0, %c0_i32 : i32, i32
  }
  func.func @transform_1(%arg0: i32) -> (i32, i32) {
    %c0_i32 = arith.constant 0 : i32
    %c0_i32_0 = arith.constant 0 : i32
    return %arg0, %c0_i32 : i32, i32
  }
  func.func @transform_2(%arg0: i32) -> (i32, i32) {
    %c0_i32 = arith.constant 0 : i32
    %c0_i32_0 = arith.constant 0 : i32
    %c0_i32_1 = arith.constant 0 : i32
    return %c0_i32, %c0_i32_0 : i32, i32
  }
  func.func @transform_3(%arg0: i32) -> (i32, i32) {
    %c0_i32 = arith.constant 0 : i32
    %c0_i32_0 = arith.constant 0 : i32
    %c0_i32_1 = arith.constant 0 : i32
    return %c0_i32, %c0_i32_0 : i32, i32
  }
  func.func @transform_4(%arg0: i32) -> (i32, i32) {
    %c0_i32 = arith.constant 0 : i32
    %c0_i32_0 = arith.constant 0 : i32
    return %arg0, %c0_i32 : i32, i32
  }
}

</mosaic_0001>

<llo_original>
// kernel: tpu_custom_call.1
$region0: #{tpu_custom_call.1}
  #allocation0 [shape = 'u32[]', space=smem, size = 0x4, offset = 0x4, fixed_abs, tag = 'smem constant byte address 0x4 - core index']
  #allocation1 [shape = 'u32[144,128]{1,0:T(1,128)}', space=vmem, size = 0x12000, scoped, tag = 'internal scratch']
  %s0 = inlined_call_operand.hbm [shape: f32[8,64], index: 0, kind: input, shape index: {}]
  %s1 = inlined_call_operand.hbm [shape: f32[8,16], index: 1, kind: input, shape index: {}]
  %s2 = inlined_call_operand.hbm [shape: f32[64,128], index: 2, kind: input, shape index: {}]
  %s3 = inlined_call_operand.hbm [shape: f32[16,128], index: 3, kind: input, shape index: {}]
  %s4 = inlined_call_operand.hbm [shape: f32[8,256], index: 4, kind: output, shape index: {}]
  %s5 = sld [smem:[#allocation0]]
  $region42: #{tpu_custom_call.1} parent=0
    _
  %s7 = ssub.s32 1, %s5
  %s8 = scalar_select 0, %s7, %s5
  $region1: #{tpu_custom_call.1} parent=0
    #allocation2 [shape = 'u8[4096]{0}', space=vmem, size = 0x1000, scoped, tag = 'input window, operand 0, single buffered']
    #allocation3 [shape = 's32[1]{0}', space=sflag, size = 0x4, scoped, tag = 'scoped memory for tpu_custom_call.1']
    #allocation4 [shape = 's32[1]{0}', space=sflag, size = 0x4, scoped, tag = 'scoped memory for tpu_custom_call.1']
    #allocation5 [shape = 'u8[4096]{0}', space=vmem, size = 0x1000, scoped, tag = 'input window, operand 1, single buffered']
    #allocation6 [shape = 's32[1]{0}', space=sflag, size = 0x4, scoped, tag = 'scoped memory for tpu_custom_call.1']
    #allocation7 [shape = 'u8[32768]{0}', space=vmem, size = 0x8000, scoped, tag = 'input window, operand 2, single buffered']
    #allocation8 [shape = 'u8[8192]{0}', space=vmem, size = 0x2000, scoped, tag = 'input window, operand 3, single buffered']
    #allocation9 [shape = 's32[1]{0}', space=sflag, size = 0x4, scoped, tag = 'scoped memory for tpu_custom_call.1']
    #allocation10 [shape = 'u8[8192]{0}', space=vmem, size = 0x2000, scoped, tag = 'output window, operand 0, single buffered']
    %9 = vsyncpa [#allocation3], 0
    %10 = vsyncpa [#allocation6], 0
    %11 = vsyncpa [#allocation9], 0
    %12 = vsyncpa [#allocation4], 0
    // Predicated region
    $region2: #{tpu_custom_call.1} parent=1 // pred_check
      _
    $region3: #{tpu_custom_call.1} parent=1 // pred_check_branch
      %14 = sbr.rel (0) target = $region5
    $region4: #{tpu_custom_call.1} parent=1 // pred_region
      %s16 = ssub.s32 128, 128
      %17 = vsyncadd [#allocation3], %s16
      %s19 = sshll.u32 [#allocation2], 4
      %s20 = int_to_ptr.vmem [resolvable:$true] %s19
      %22 = dma.hbm_to_vmem [thread:$0]  %s0, 128, %s20, [#allocation3]
    $region5: #{tpu_custom_call.1} parent=1 // pred_fallthru
      _
    // Predicated region
    $region6: #{tpu_custom_call.1} parent=1 // pred_check
      _
    $region7: #{tpu_custom_call.1} parent=1 // pred_check_branch
      %24 = sbr.rel (0) target = $region9
    $region8: #{tpu_custom_call.1} parent=1 // pred_region
      %s26 = ssub.s32 128, 128
      %27 = vsyncadd [#allocation6], %s26
      %s29 = sshll.u32 [#allocation5], 4
      %s30 = int_to_ptr.vmem [resolvable:$true] %s29
      %32 = dma.hbm_to_vmem [thread:$0]  %s1, 128, %s30, [#allocation6]
    $region9: #{tpu_custom_call.1} parent=1 // pred_fallthru
      _
    // Predicated region
    $region10: #{tpu_custom_call.1} parent=1 // pred_check
      _
    $region11: #{tpu_custom_call.1} parent=1 // pred_check_branch
      %34 = sbr.rel (0) target = $region13
    $region12: #{tpu_custom_call.1} parent=1 // pred_region
      %s36 = ssub.s32 1024, 1024
      %37 = vsyncadd [#allocation6], %s36
      %s38 = sshll.u32 [#allocation7], 4
      %s39 = int_to_ptr.vmem [resolvable:$true] %s38
      %44 = dma.hbm_to_vmem [thread:$0]  %s2, 1024, %s39, [#allocation6], 128, 128, 8
    $region13: #{tpu_custom_call.1} parent=1 // pred_fallthru
      _
    // Predicated region
    $region14: #{tpu_custom_call.1} parent=1 // pred_check
      _
    $region15: #{tpu_custom_call.1} parent=1 // pred_check_branch
      %46 = sbr.rel (0) target = $region17
    $region16: #{tpu_custom_call.1} parent=1 // pred_region
      %s48 = ssub.s32 256, 256
      %49 = vsyncadd [#allocation9], %s48
      %s50 = sshll.u32 [#allocation8], 4
      %s51 = int_to_ptr.vmem [resolvable:$true] %s50
      %56 = dma.hbm_to_vmem [thread:$0]  %s3, 256, %s51, [#allocation9], 128, 128, 8
    $region17: #{tpu_custom_call.1} parent=1 // pred_fallthru
      _
    // Predicated region
    $region18: #{tpu_custom_call.1} parent=1 // pred_check
      _
    $region19: #{tpu_custom_call.1} parent=1 // pred_check_branch
      %58 = sbr.rel (0) target = $region21
    $region20: #{tpu_custom_call.1} parent=1 // pred_region
      %59 = dma.done [#allocation3], 128
    $region21: #{tpu_custom_call.1} parent=1 // pred_fallthru
      _
    // Predicated region
    $region22: #{tpu_custom_call.1} parent=1 // pred_check
      _
    $region23: #{tpu_custom_call.1} parent=1 // pred_check_branch
      %61 = sbr.rel (0) target = $region25
    $region24: #{tpu_custom_call.1} parent=1 // pred_region
      %62 = dma.done [#allocation6], 128
    $region25: #{tpu_custom_call.1} parent=1 // pred_fallthru
      _
    // Predicated region
    $region26: #{tpu_custom_call.1} parent=1 // pred_check
      _
    $region27: #{tpu_custom_call.1} parent=1 // pred_check_branch
      %64 = sbr.rel (0) target = $region29
    $region28: #{tpu_custom_call.1} parent=1 // pred_region
      %65 = dma.done [#allocation6], 1024
    $region29: #{tpu_custom_call.1} parent=1 // pred_fallthru
      _
    // Predicated region
    $region30: #{tpu_custom_call.1} parent=1 // pred_check
      _
    $region31: #{tpu_custom_call.1} parent=1 // pred_check_branch
      %67 = sbr.rel (0) target = $region33
    $region32: #{tpu_custom_call.1} parent=1 // pred_region
      %68 = dma.done [#allocation9], 256
    $region33: #{tpu_custom_call.1} parent=1 // pred_fallthru
      _
    %v69 = vld [vmem:[#allocation2] sm:$0xff]
    %v70 = vld [vmem:[#allocation7] sm:$0xff]
    %v71 = vld [vmem:[#allocation7 + $0x8] sm:$0xff]
    %v72 = vld [vmem:[#allocation7 + $0x10] sm:$0xff]
    %v73 = vld [vmem:[#allocation7 + $0x18] sm:$0xff]
    %v74 = vld [vmem:[#allocation7 + $0x20] sm:$0xff]
    %v75 = vld [vmem:[#allocation7 + $0x28] sm:$0xff]
    %v76 = vld [vmem:[#allocation7 + $0x30] sm:$0xff]
    %v77 = vld [vmem:[#allocation7 + $0x38] sm:$0xff]
    %vm78 = vcmask 523264
    %v80 = vsel %vm78, %v69, 0
    %82 = vmatprep.subr.mxu0 0.0
    %83 = vmatpush1.msra.mxu0 %v70
    %84 = vmatprep.subr.mxu0 0.0
    %85 = vmatpush1.msra.mxu0 %v71
    %86 = vmatprep.subr.mxu0 0.0
    %87 = vmatpush1.msra.mxu0 %v72
    %88 = vmatprep.subr.mxu0 0.0
    %89 = vmatpush1.msra.mxu0 %v73
    %90 = vmatprep.subr.mxu0 0.0
    %91 = vmatpush1.msra.mxu0 %v74
    %92 = vmatprep.subr.mxu0 0.0
    %93 = vmatpush1.msra.mxu0 %v75
    %94 = vmatprep.subr.mxu0 0.0
    %95 = vmatpush1.msra.mxu0 %v76
    %96 = vmatprep.subr.mxu0 0.0
    %97 = vmatpush1.msra.mxu0 %v77
    %98 = vmatprep.subr.mxu0 0.0
    %99 = vmatpush1.msra.mxu0 0.0
    %100 = vmatprep.subr.mxu0 0.0
    %101 = vmatpush1.msra.mxu0 0.0
    %102 = vmatprep.subr.mxu0 0.0
    %103 = vmatpush1.msra.mxu0 0.0
    %104 = vmatprep.subr.mxu0 0.0
    %105 = vmatpush1.msra.mxu0 0.0
    %106 = vmatprep.subr.mxu0 0.0
    %107 = vmatpush1.msra.mxu0 0.0
    %108 = vmatprep.subr.mxu0 0.0
    %109 = vmatpush1.msra.mxu0 0.0
    %110 = vmatprep.subr.mxu0 0.0
    %111 = vmatpush1.msra.mxu0 0.0
    %112 = vmatprep.subr.mxu0 0.0
    %113 = vmatpush1.msra.mxu0 0.0
    %114 = vmatprep.subr.mxu0 0.0
    %115 = vmatpush1.msra.mxu0 0.0
    %116 = vmatprep.subr.mxu0 0.0
    %117 = vmatpush1.msra.mxu0 0.0
    %118 = vmatprep.subr.mxu0 0.0
    %119 = vmatpush1.msra.mxu0 0.0
    %120 = vmatprep.subr.mxu0 0.0
    %121 = vmatpush1.msra.mxu0 0.0
    %122 = vmatprep.subr.mxu0 0.0
    %123 = vmatpush1.msra.mxu0 0.0
    %124 = vmatprep.subr.mxu0 0.0
    %125 = vmatpush1.msra.mxu0 0.0
    %126 = vmatprep.subr.mxu0 0.0
    %127 = vmatpush1.msra.mxu0 0.0
    %128 = vmatprep.subr.mxu0 0.0
    %129 = vmatpush1.msra.mxu0 0.0
    %130 = vmatprep.subr.mxu0 0.0
    %131 = vmatpush1.msra.mxu0 0.0
    %132 = vmatprep.subr.mxu0 0.0
    %133 = vmatpush1.msra.mxu0 0.0
    %134 = vmatprep.subr.mxu0 0.0
    %135 = vmatpush1.msra.mxu0 0.0
    %136 = vmatprep.subr.mxu0 0.0
    %137 = vmatpush1.msra.mxu0 0.0
    %138 = vmatprep.subr.mxu0 0.0
    %139 = vmatpush1.msra.mxu0 0.0
    %140 = vmatprep.subr.mxu0 0.0
    %141 = vmatpush1.msra.mxu0 0.0
    %142 = vmatprep.subr.mxu0 0.0
    %143 = vmatpush1.msra.mxu0 0.0
    %144 = vmatprep.subr.mxu0 0.0
    %145 = vmatpush1.msra.mxu0 0.0
    %146 = vmatprep.mubr.f32.mxu0 0.0
    %147 = vmatmul.mubr.f32.gmra.mrb[0].mxu0 %v80
    %v148 = vpop.f32.mrb[0].mxu0
    %v149 = vadd.f32 0.0, %v148
    %v150 = vpop.f32.mrb[0].mxu0
    %151 = vdwg.mxu0
    %v152 = vld [vmem:[#allocation5] sm:$0xff]
    %v153 = vld [vmem:[#allocation8] sm:$0xff]
    %v154 = vld [vmem:[#allocation8 + $0x8] sm:$0xff]
    %vm155 = vcmask 130048
    %v157 = vsel %vm155, %v152, 0
    %159 = vmatprep.subr.mxu0 0.0
    %160 = vmatpush1.msra.mxu0 %v153
    %161 = vmatprep.subr.mxu0 0.0
    %162 = vmatpush1.msra.mxu0 %v154
    %163 = vmatprep.subr.mxu0 0.0
    %164 = vmatpush1.msra.mxu0 0.0
    %165 = vmatprep.subr.mxu0 0.0
    %166 = vmatpush1.msra.mxu0 0.0
    %167 = vmatprep.subr.mxu0 0.0
    %168 = vmatpush1.msra.mxu0 0.0
    %169 = vmatprep.subr.mxu0 0.0
    %170 = vmatpush1.msra.mxu0 0.0
    %171 = vmatprep.subr.mxu0 0.0
    %172 = vmatpush1.msra.mxu0 0.0
    %173 = vmatprep.subr.mxu0 0.0
    %174 = vmatpush1.msra.mxu0 0.0
    %175 = vmatprep.subr.mxu0 0.0
    %176 = vmatpush1.msra.mxu0 0.0
    %177 = vmatprep.subr.mxu0 0.0
    %178 = vmatpush1.msra.mxu0 0.0
    %179 = vmatprep.subr.mxu0 0.0
    %180 = vmatpush1.msra.mxu0 0.0
    %181 = vmatprep.subr.mxu0 0.0
    %182 = vmatpush1.msra.mxu0 0.0
    %183 = vmatprep.subr.mxu0 0.0
    %184 = vmatpush1.msra.mxu0 0.0
    %185 = vmatprep.subr.mxu0 0.0
    %186 = vmatpush1.msra.mxu0 0.0
    %187 = vmatprep.subr.mxu0 0.0
    %188 = vmatpush1.msra.mxu0 0.0
    %189 = vmatprep.subr.mxu0 0.0
    %190 = vmatpush1.msra.mxu0 0.0
    %191 = vmatprep.subr.mxu0 0.0
    %192 = vmatpush1.msra.mxu0 0.0
    %193 = vmatprep.subr.mxu0 0.0
    %194 = vmatpush1.msra.mxu0 0.0
    %195 = vmatprep.subr.mxu0 0.0
    %196 = vmatpush1.msra.mxu0 0.0
    %197 = vmatprep.subr.mxu0 0.0
    %198 = vmatpush1.msra.mxu0 0.0
    %199 = vmatprep.subr.mxu0 0.0
    %200 = vmatpush1.msra.mxu0 0.0
    %201 = vmatprep.subr.mxu0 0.0
    %202 = vmatpush1.msra.mxu0 0.0
    %203 = vmatprep.subr.mxu0 0.0
    %204 = vmatpush1.msra.mxu0 0.0
    %205 = vmatprep.subr.mxu0 0.0
    %206 = vmatpush1.msra.mxu0 0.0
    %207 = vmatprep.subr.mxu0 0.0
    %208 = vmatpush1.msra.mxu0 0.0
    %209 = vmatprep.subr.mxu0 0.0
    %210 = vmatpush1.msra.mxu0 0.0
    %211 = vmatprep.subr.mxu0 0.0
    %212 = vmatpush1.msra.mxu0 0.0
    %213 = vmatprep.subr.mxu0 0.0
    %214 = vmatpush1.msra.mxu0 0.0
    %215 = vmatprep.subr.mxu0 0.0
    %216 = vmatpush1.msra.mxu0 0.0
    %217 = vmatprep.subr.mxu0 0.0
    %218 = vmatpush1.msra.mxu0 0.0
    %219 = vmatprep.subr.mxu0 0.0
    %220 = vmatpush1.msra.mxu0 0.0
    %221 = vmatprep.subr.mxu0 0.0
    %222 = vmatpush1.msra.mxu0 0.0
    %223 = vmatprep.mubr.f32.mxu0 0.0
    %224 = vmatmul.mubr.f32.gmra.mrb[0].mxu0 %v157
    %v225 = vpop.f32.mrb[0].mxu0
    %v226 = vadd.f32 0.0, %v225
    %v227 = vpop.f32.mrb[0].mxu0
    %228 = vdwg.mxu0
    %v229 = vmax.f32 %v149, 0.0
    %v230 = vmax.f32 %v226, 0.0
    %231 = vst [vmem:[#allocation10] sm:$0xff] %v229
    %232 = vst [vmem:[#allocation10 + $0x8] sm:$0xff] %v230
    // Predicated region
    $region34: #{tpu_custom_call.1} parent=1 // pred_check
      _
    $region35: #{tpu_custom_call.1} parent=1 // pred_check_branch
      %234 = sbr.rel (0) target = $region37
    $region36: #{tpu_custom_call.1} parent=1 // pred_region
      %s236 = ssub.s32 256, 256
      %237 = vsyncadd [#allocation4], %s236
      %s239 = sshll.u32 [#allocation10], 4
      %s240 = int_to_ptr.vmem [resolvable:$true] %s239
      %242 = dma.vmem_to_hbm [thread:$0]  %s240, 256, %s4, [#allocation4]
    $region37: #{tpu_custom_call.1} parent=1 // pred_fallthru
      _
    // Predicated region
    $region38: #{tpu_custom_call.1} parent=1 // pred_check
      _
    $region39: #{tpu_custom_call.1} parent=1 // pred_check_branch
      %244 = sbr.rel (0) target = $region41
    $region40: #{tpu_custom_call.1} parent=1 // pred_region
      %245 = dma.done [#allocation4], 256
    $region41: #{tpu_custom_call.1} parent=1 // pred_fallthru
      _
    %246 = vsyncpa [#allocation3], 1
    %247 = vsyncpa [#allocation6], 1
    %248 = vsyncpa [#allocation9], 1
    %249 = vsyncpa [#allocation4], 1

</llo_original>
